<compile_context>
chip_gen: v7x
topology: tpu7x:2x2x1
jax: 0.10.0
libtpu: 0.0.40
codegen_flags: <defaults>
</compile_context>

<pallas_src>
import functools

import jax
import jax.numpy as jnp
from jax.experimental import pallas as pl
from jax.experimental.pallas import tpu as pltpu


def wrapped_model_kernel(p_ref, wc_ref, bc_ref, wf_ref, bf_ref, out_ref, *, NB, HW):
    """One batch tile (NB images) per grid step.

    p_ref  : (NB, HW, K)   im2col patches, K = KH*KW*Cin
    wc_ref : (K, Cout)     conv weight, reshaped
    bc_ref : (1, Cout)     conv bias
    wf_ref : (Cout, NCp)   fc weight, padded to lane-dense NCp
    bf_ref : (1, NCp)      fc bias, padded
    out_ref: (NB, NCp)     per-step logits block
    """
    K = p_ref.shape[-1]
    Cout = wc_ref.shape[-1]

    # --- conv2d as one MXU matmul: (NB*HW, K) @ (K, Cout) ---
    patches = p_ref[...].reshape(NB * HW, K)
    conv = jnp.dot(patches, wc_ref[...], preferred_element_type=jnp.float32)

    # --- bias + ReLU (kept in vregs, no scratch) ---
    conv = jnp.maximum(conv + bc_ref[...], 0.0)            # (NB*HW, Cout)

    # --- global average pool + flatten -> (NB, Cout) ---
    feats = jnp.mean(conv.reshape(NB, HW, Cout), axis=1)

    # --- fc: (NB, Cout) @ (Cout, NCp) + bias ---
    logits = jnp.dot(feats, wf_ref[...],
                     preferred_element_type=jnp.float32) + bf_ref[...]

    out_ref[...] = logits.astype(out_ref.dtype)


def wrapped_model_forward(x_nchw, wconv, bconv, wfc, bfc, *, nb=8):
    """x_nchw: (N, Cin, H, W) float32 (PyTorch layout). Returns (N, num_classes)."""
    N, Cin, H, W = x_nchw.shape
    KH, KW, _, Cout = wconv.shape
    NC = wfc.shape[1]
    ph, pw = (KH - 1) // 2, (KW - 1) // 2

    # --- layout prep (wrapper side) ---
    x = jnp.transpose(x_nchw, (0, 2, 3, 1))                    # NCHW -> NHWC
    xp = jnp.pad(x, ((0, 0), (ph, ph), (pw, pw), (0, 0)))      # Conv2d zero padding

    # im2col: tap ordering (kh, kw, cin) matches wconv.reshape(KH*KW*Cin, Cout)
    taps = [xp[:, kh:kh + H, kw:kw + W, :]
            for kh in range(KH) for kw in range(KW)]
    K = KH * KW * Cin
    HW = H * W
    patches = jnp.concatenate(taps, axis=-1).reshape(N, HW, K)

    wc2d = wconv.reshape(K, Cout)
    bc2d = bconv.reshape(1, Cout)

    # pad fc output columns to a lane-dense multiple of 128 (unmasked stores)
    NCp = ((NC + 127) // 128) * 128
    wfp = jnp.pad(wfc, ((0, 0), (0, NCp - NC)))
    bfp = jnp.pad(bfc.reshape(1, NC), ((0, 0), (0, NCp - NC)))

    # batch tiling: NB images per grid step
    NB = min(nb, N)
    Npad = pl.cdiv(N, NB) * NB
    if Npad != N:
        patches = jnp.pad(patches, ((0, Npad - N), (0, 0), (0, 0)))

    kern = functools.partial(wrapped_model_kernel, NB=NB, HW=HW)

    out = pl.pallas_call(
        kern,
        out_shape=jax.ShapeDtypeStruct((Npad, NCp), jnp.float32),
        grid_spec=pltpu.PrefetchScalarGridSpec(
            num_scalar_prefetch=0,
            grid=(Npad // NB,),
            in_specs=[
                pl.BlockSpec((NB, HW, K), lambda b: (b, 0, 0)),
                pl.BlockSpec((K, Cout), lambda b: (0, 0)),
                pl.BlockSpec((1, Cout), lambda b: (0, 0)),
                pl.BlockSpec((Cout, NCp), lambda b: (0, 0)),
                pl.BlockSpec((1, NCp), lambda b: (0, 0)),
            ],
            out_specs=pl.BlockSpec((NB, NCp), lambda b: (b, 0)),
        ),
        compiler_params=pltpu.CompilerParams(
            dimension_semantics=("parallel",),       # batch axis -> megacore on v7x
            vmem_limit_bytes=96 * 1024 * 1024),
    )(patches, wc2d, bc2d, wfp, bfp)

    return out[:N, :NC]


def reference_forward(x_nchw, wconv, bconv, wfc, bfc):
    """Pure-JAX reference matching the PyTorch forward semantics."""
    x = jnp.transpose(x_nchw, (0, 2, 3, 1))
    y = jax.lax.conv_general_dilated(
        x, wconv, window_strides=(1, 1), padding="SAME",
        dimension_numbers=("NHWC", "HWIO", "NHWC"))
    y = jax.nn.relu(y + bconv)                 # bconv: (1, Cout) broadcasts over N,H,W
    feats = jnp.mean(y, axis=(1, 2))           # global average pool + flatten -> (N, Cout)
    return feats @ wfc + bfc                   # fc -> (N, NC)


if __name__ == "__main__":
    N, Cin, H, W = 2, 4, 16, 16
    Cout, NC = 8, 10
    KH = KW = 3

    key = jax.random.PRNGKey(0)
    kx, kwc, kbc, kwf, kbf = jax.random.split(key, 5)

    x = jax.random.normal(kx, (N, Cin, H, W), jnp.float32)
    wconv = jax.random.normal(kwc, (KH, KW, Cin, Cout), jnp.float32) * 0.1
    bconv = jax.random.normal(kbc, (1, Cout), jnp.float32) * 0.1
    wfc = jax.random.normal(kwf, (Cout, NC), jnp.float32) * 0.1
    bfc = jax.random.normal(kbf, (1, NC), jnp.float32) * 0.1

    out = wrapped_model_forward(x, wconv, bconv, wfc, bfc)
    out = jax.block_until_ready(out)

    ref = reference_forward(x, wconv, bconv, wfc, bfc)
    assert out.shape == (N, NC)
    assert jnp.allclose(out, ref, atol=1e-4, rtol=1e-4), (
        f"mismatch: max abs err {jnp.max(jnp.abs(out - ref))}")

    print("KERNEL_OK")
</pallas_src>

<mosaic_0001>
module attributes {stable_mosaic.version = 11 : i64} {
  func.func @wrapped_model_kernel(%arg0: i32, %arg1: memref<2x256x36xf32, #tpu.memory_space<vmem>>, %arg2: memref<36x8xf32, #tpu.memory_space<vmem>>, %arg3: memref<1x8xf32, #tpu.memory_space<vmem>>, %arg4: memref<8x128xf32, #tpu.memory_space<vmem>>, %arg5: memref<1x128xf32, #tpu.memory_space<vmem>>, %arg6: memref<2x128xf32, #tpu.memory_space<vmem>>) attributes {dimension_semantics = [#tpu.dimension_semantics<parallel>], iteration_bounds = array<i64: 1>, scalar_prefetch = 0 : i64, scratch_operands = 0 : i64, tpu.core_type = #tpu.core_type<tc>, window_params = [{transform_indices = @transform_0, window_bounds = array<i64: 2, 256, 36>}, {pipeline_mode = #tpu.pipeline_mode<synchronous>, transform_indices = @transform_1, window_bounds = array<i64: 36, 8>}, {pipeline_mode = #tpu.pipeline_mode<synchronous>, transform_indices = @transform_2, window_bounds = array<i64: 1, 8>}, {pipeline_mode = #tpu.pipeline_mode<synchronous>, transform_indices = @transform_3, window_bounds = array<i64: 8, 128>}, {pipeline_mode = #tpu.pipeline_mode<synchronous>, transform_indices = @transform_4, window_bounds = array<i64: 1, 128>}, {transform_indices = @transform_5, window_bounds = array<i64: 2, 128>}]} {
    %c0 = arith.constant 0 : index
    %c0_0 = arith.constant 0 : index
    %c0_1 = arith.constant 0 : index
    %0 = vector.load %arg1[%c0, %c0_0, %c0_1] : memref<2x256x36xf32, #tpu.memory_space<vmem>>, vector<2x256x36xf32>
    %1 = vector.shape_cast %0 : vector<2x256x36xf32> to vector<512x36xf32>
    %c0_2 = arith.constant 0 : index
    %c0_3 = arith.constant 0 : index
    %2 = vector.load %arg2[%c0_2, %c0_3] : memref<36x8xf32, #tpu.memory_space<vmem>>, vector<36x8xf32>
    %cst = arith.constant dense<0.000000e+00> : vector<512x8xf32>
    %3 = tpu.matmul %1, %2, %cst {dimension_numbers = #tpu.dot_dimension_numbers<[1], [0], [0], [1], [0, 0, 1, 1], [], []>} : vector<512x36xf32>, vector<36x8xf32>, vector<512x8xf32> -> vector<512x8xf32>
    %c0_4 = arith.constant 0 : index
    %c0_5 = arith.constant 0 : index
    %4 = vector.load %arg3[%c0_4, %c0_5] : memref<1x8xf32, #tpu.memory_space<vmem>>, vector<1x8xf32>
    %5 = vector.broadcast %4 : vector<1x8xf32> to vector<512x8xf32>
    %6 = arith.addf %3, %5 : vector<512x8xf32>
    %cst_6 = arith.constant 0.000000e+00 : f32
    %7 = vector.broadcast %cst_6 : f32 to vector<512x8xf32>
    %8 = arith.maximumf %6, %7 : vector<512x8xf32>
    %9 = vector.shape_cast %8 : vector<512x8xf32> to vector<2x256x8xf32>
    %cst_7 = arith.constant dense<0.000000e+00> : vector<2x8xf32>
    %10 = vector.multi_reduction <add>, %9, %cst_7 [1] : vector<2x256x8xf32> to vector<2x8xf32>
    %cst_8 = arith.constant 2.560000e+02 : f32
    %11 = vector.broadcast %cst_8 : f32 to vector<2x8xf32>
    %12 = arith.divf %10, %11 : vector<2x8xf32>
    %c0_9 = arith.constant 0 : index
    %c0_10 = arith.constant 0 : index
    %13 = vector.load %arg4[%c0_9, %c0_10] : memref<8x128xf32, #tpu.memory_space<vmem>>, vector<8x128xf32>
    %cst_11 = arith.constant dense<0.000000e+00> : vector<2x128xf32>
    %14 = tpu.matmul %12, %13, %cst_11 {dimension_numbers = #tpu.dot_dimension_numbers<[1], [0], [0], [1], [0, 0, 1, 1], [], []>} : vector<2x8xf32>, vector<8x128xf32>, vector<2x128xf32> -> vector<2x128xf32>
    %c0_12 = arith.constant 0 : index
    %c0_13 = arith.constant 0 : index
    %15 = vector.load %arg5[%c0_12, %c0_13] : memref<1x128xf32, #tpu.memory_space<vmem>>, vector<1x128xf32>
    %16 = vector.broadcast %15 : vector<1x128xf32> to vector<2x128xf32>
    %17 = arith.addf %14, %16 : vector<2x128xf32>
    %c0_14 = arith.constant 0 : index
    %c0_15 = arith.constant 0 : index
    %18 = vector.load %arg6[%c0_14, %c0_15] : memref<2x128xf32, #tpu.memory_space<vmem>>, vector<2x128xf32>
    tpu.vector_store %arg6[%c0_14, %c0_15], %17 {strides = array<i32>} : memref<2x128xf32, #tpu.memory_space<vmem>>, vector<2x128xf32>,
    return
  }
  func.func @transform_0(%arg0: i32) -> (i32, i32, i32) {
    %c0_i32 = arith.constant 0 : i32
    %c0_i32_0 = arith.constant 0 : i32
    %c0_i32_1 = arith.constant 0 : i32
    return %arg0, %c0_i32, %c0_i32_0 : i32, i32, i32
  }
  func.func @transform_1(%arg0: i32) -> (i32, i32) {
    %c0_i32 = arith.constant 0 : i32
    %c0_i32_0 = arith.constant 0 : i32
    %c0_i32_1 = arith.constant 0 : i32
    return %c0_i32, %c0_i32_0 : i32, i32
  }
  func.func @transform_2(%arg0: i32) -> (i32, i32) {
    %c0_i32 = arith.constant 0 : i32
    %c0_i32_0 = arith.constant 0 : i32
    %c0_i32_1 = arith.constant 0 : i32
    return %c0_i32, %c0_i32_0 : i32, i32
  }
  func.func @transform_3(%arg0: i32) -> (i32, i32) {
    %c0_i32 = arith.constant 0 : i32
    %c0_i32_0 = arith.constant 0 : i32
    %c0_i32_1 = arith.constant 0 : i32
    return %c0_i32, %c0_i32_0 : i32, i32
  }
  func.func @transform_4(%arg0: i32) -> (i32, i32) {
    %c0_i32 = arith.constant 0 : i32
    %c0_i32_0 = arith.constant 0 : i32
    %c0_i32_1 = arith.constant 0 : i32
    return %c0_i32, %c0_i32_0 : i32, i32
  }
  func.func @transform_5(%arg0: i32) -> (i32, i32) {
    %c0_i32 = arith.constant 0 : i32
    %c0_i32_0 = arith.constant 0 : i32
    return %arg0, %c0_i32 : i32, i32
  }
}

</mosaic_0001>

<llo_original>
// kernel: tpu_custom_call.1
$region0: #{tpu_custom_call.1}
  #allocation0 [shape = 'u32[]', space=smem, size = 0x4, offset = 0x4, fixed_abs, tag = 'smem constant byte address 0x4 - core index']
  #allocation1 [shape = 'u32[144,128]{1,0:T(1,128)}', space=vmem, size = 0x12000, scoped, tag = 'internal scratch']
  %s0 = inlined_call_operand.hbm [shape: f32[2,256,36], index: 0, kind: input, shape index: {}]
  %s1 = inlined_call_operand.hbm [shape: f32[36,8], index: 1, kind: input, shape index: {}]
  %s2 = inlined_call_operand.hbm [shape: f32[1,8], index: 2, kind: input, shape index: {}]
  %s3 = inlined_call_operand.hbm [shape: f32[8,128], index: 3, kind: input, shape index: {}]
  %s4 = inlined_call_operand.hbm [shape: f32[1,128], index: 4, kind: input, shape index: {}]
  %s5 = inlined_call_operand.hbm [shape: f32[2,128], index: 5, kind: output, shape index: {}]
  %s6 = sld [smem:[#allocation0]]
  $region50: #{tpu_custom_call.1} parent=0
    _
  %s8 = ssub.s32 1, %s6
  %s9 = scalar_select 0, %s8, %s6
  $region1: #{tpu_custom_call.1} parent=0
    #allocation2 [shape = 'u8[262144]{0}', space=vmem, size = 0x40000, scoped, tag = 'input window, operand 0, single buffered']
    #allocation3 [shape = 's32[1]{0}', space=sflag, size = 0x4, scoped, tag = 'scoped memory for tpu_custom_call.1']
    #allocation4 [shape = 's32[1]{0}', space=sflag, size = 0x4, scoped, tag = 'scoped memory for tpu_custom_call.1']
    #allocation5 [shape = 'u8[20480]{0}', space=vmem, size = 0x5000, scoped, tag = 'input window, operand 1, single buffered']
    #allocation6 [shape = 's32[1]{0}', space=sflag, size = 0x4, scoped, tag = 'scoped memory for tpu_custom_call.1']
    #allocation7 [shape = 'u8[512]{0}', space=vmem, size = 0x400, scoped, tag = 'input window, operand 2, single buffered']
    #allocation8 [shape = 'u8[4096]{0}', space=vmem, size = 0x1000, scoped, tag = 'input window, operand 3, single buffered']
    #allocation9 [shape = 's32[1]{0}', space=sflag, size = 0x4, scoped, tag = 'scoped memory for tpu_custom_call.1']
    #allocation10 [shape = 'u8[512]{0}', space=vmem, size = 0x400, scoped, tag = 'input window, operand 4, single buffered']
    #allocation11 [shape = 'u8[1024]{0}', space=vmem, size = 0x400, scoped, tag = 'output window, operand 0, single buffered']
    %10 = vsyncpa [#allocation3], 0
    %11 = vsyncpa [#allocation6], 0
    %12 = vsyncpa [#allocation9], 0
    %13 = vsyncpa [#allocation4], 0
    // Predicated region
    $region2: #{tpu_custom_call.1} parent=1 // pred_check
      _
    $region3: #{tpu_custom_call.1} parent=1 // pred_check_branch
      %15 = sbr.rel (0) target = $region5
    $region4: #{tpu_custom_call.1} parent=1 // pred_region
      %s17 = ssub.s32 8192, 8192
      %18 = vsyncadd [#allocation3], %s17
      %s19 = sshll.u32 [#allocation2], 4
      %s20 = int_to_ptr.vmem [resolvable:$true] %s19
      %25 = dma.hbm_to_vmem [thread:$0]  %s0, 8192, %s20, [#allocation3], 128, 128, 8
    $region5: #{tpu_custom_call.1} parent=1 // pred_fallthru
      _
    // Predicated region
    $region6: #{tpu_custom_call.1} parent=1 // pred_check
      _
    $region7: #{tpu_custom_call.1} parent=1 // pred_check_branch
      %27 = sbr.rel (0) target = $region9
    $region8: #{tpu_custom_call.1} parent=1 // pred_region
      %s29 = ssub.s32 640, 640
      %30 = vsyncadd [#allocation6], %s29
      %s31 = sshll.u32 [#allocation5], 4
      %s32 = int_to_ptr.vmem [resolvable:$true] %s31
      %37 = dma.hbm_to_vmem [thread:$0]  %s1, 640, %s32, [#allocation6], 128, 128, 8
    $region9: #{tpu_custom_call.1} parent=1 // pred_fallthru
      _
    // Predicated region
    $region10: #{tpu_custom_call.1} parent=1 // pred_check
      _
    $region11: #{tpu_custom_call.1} parent=1 // pred_check_branch
      %39 = sbr.rel (0) target = $region13
    $region12: #{tpu_custom_call.1} parent=1 // pred_region
      %s41 = ssub.s32 16, 16
      %42 = vsyncadd [#allocation6], %s41
      %s44 = sshll.u32 [#allocation7], 4
      %s45 = int_to_ptr.vmem [resolvable:$true] %s44
      %47 = dma.hbm_to_vmem [thread:$0]  %s2, 16, %s45, [#allocation6]
    $region13: #{tpu_custom_call.1} parent=1 // pred_fallthru
      _
    // Predicated region
    $region14: #{tpu_custom_call.1} parent=1 // pred_check
      _
    $region15: #{tpu_custom_call.1} parent=1 // pred_check_branch
      %49 = sbr.rel (0) target = $region17
    $region16: #{tpu_custom_call.1} parent=1 // pred_region
      %s51 = ssub.s32 128, 128
      %52 = vsyncadd [#allocation9], %s51
      %s54 = sshll.u32 [#allocation8], 4
      %s55 = int_to_ptr.vmem [resolvable:$true] %s54
      %57 = dma.hbm_to_vmem [thread:$0]  %s3, 128, %s55, [#allocation9]
    $region17: #{tpu_custom_call.1} parent=1 // pred_fallthru
      _
    // Predicated region
    $region18: #{tpu_custom_call.1} parent=1 // pred_check
      _
    $region19: #{tpu_custom_call.1} parent=1 // pred_check_branch
      %59 = sbr.rel (0) target = $region21
    $region20: #{tpu_custom_call.1} parent=1 // pred_region
      %s61 = ssub.s32 16, 16
      %62 = vsyncadd [#allocation9], %s61
      %s64 = sshll.u32 [#allocation10], 4
      %s65 = int_to_ptr.vmem [resolvable:$true] %s64
      %67 = dma.hbm_to_vmem [thread:$0]  %s4, 16, %s65, [#allocation9]
    $region21: #{tpu_custom_call.1} parent=1 // pred_fallthru
      _
    // Predicated region
    $region22: #{tpu_custom_call.1} parent=1 // pred_check
      _
    $region23: #{tpu_custom_call.1} parent=1 // pred_check_branch
      %69 = sbr.rel (0) target = $region25
    $region24: #{tpu_custom_call.1} parent=1 // pred_region
      %70 = dma.done [#allocation3], 8192
    $region25: #{tpu_custom_call.1} parent=1 // pred_fallthru
      _
    // Predicated region
    $region26: #{tpu_custom_call.1} parent=1 // pred_check
      _
    $region27: #{tpu_custom_call.1} parent=1 // pred_check_branch
      %72 = sbr.rel (0) target = $region29
    $region28: #{tpu_custom_call.1} parent=1 // pred_region
      %73 = dma.done [#allocation6], 640
    $region29: #{tpu_custom_call.1} parent=1 // pred_fallthru
      _
    // Predicated region
    $region30: #{tpu_custom_call.1} parent=1 // pred_check
      _
    $region31: #{tpu_custom_call.1} parent=1 // pred_check_branch
      %75 = sbr.rel (0) target = $region33
    $region32: #{tpu_custom_call.1} parent=1 // pred_region
      %76 = dma.done [#allocation6], 16
    $region33: #{tpu_custom_call.1} parent=1 // pred_fallthru
      _
    // Predicated region
    $region34: #{tpu_custom_call.1} parent=1 // pred_check
      _
    $region35: #{tpu_custom_call.1} parent=1 // pred_check_branch
      %78 = sbr.rel (0) target = $region37
    $region36: #{tpu_custom_call.1} parent=1 // pred_region
      %79 = dma.done [#allocation9], 128
    $region37: #{tpu_custom_call.1} parent=1 // pred_fallthru
      _
    // Predicated region
    $region38: #{tpu_custom_call.1} parent=1 // pred_check
      _
    $region39: #{tpu_custom_call.1} parent=1 // pred_check_branch
      %81 = sbr.rel (0) target = $region41
    $region40: #{tpu_custom_call.1} parent=1 // pred_region
      %82 = dma.done [#allocation9], 16
    $region41: #{tpu_custom_call.1} parent=1 // pred_fallthru
      _
    %v83 = vld [vmem:[#allocation2] sm:$0xff]
    %v84 = vld [vmem:[#allocation2 + $0x8] sm:$0xff]
    %v85 = vld [vmem:[#allocation2 + $0x10] sm:$0xff]
    %v86 = vld [vmem:[#allocation2 + $0x18] sm:$0xff]
    %v87 = vld [vmem:[#allocation2 + $0x20] sm:$0xff]
    %v88 = vld [vmem:[#allocation2 + $0x28] sm:$0xff]
    %v89 = vld [vmem:[#allocation2 + $0x30] sm:$0xff]
    %v90 = vld [vmem:[#allocation2 + $0x38] sm:$0xff]
    %v91 = vld [vmem:[#allocation2 + $0x40] sm:$0xff]
    %v92 = vld [vmem:[#allocation2 + $0x48] sm:$0xff]
    %v93 = vld [vmem:[#allocation2 + $0x50] sm:$0xff]
    %v94 = vld [vmem:[#allocation2 + $0x58] sm:$0xff]
    %v95 = vld [vmem:[#allocation2 + $0x60] sm:$0xff]
    %v96 = vld [vmem:[#allocation2 + $0x68] sm:$0xff]
    %v97 = vld [vmem:[#allocation2 + $0x70] sm:$0xff]
    %v98 = vld [vmem:[#allocation2 + $0x78] sm:$0xff]
    %v99 = vld [vmem:[#allocation2 + $0x80] sm:$0xff]
    %v100 = vld [vmem:[#allocation2 + $0x88] sm:$0xff]
    %v101 = vld [vmem:[#allocation2 + $0x90] sm:$0xff]
    %v102 = vld [vmem:[#allocation2 + $0x98] sm:$0xff]
    %v103 = vld [vmem:[#allocation2 + $0xa0] sm:$0xff]
    %v104 = vld [vmem:[#allocation2 + $0xa8] sm:$0xff]
    %v105 = vld [vmem:[#allocation2 + $0xb0] sm:$0xff]
    %v106 = vld [vmem:[#allocation2 + $0xb8] sm:$0xff]
    %v107 = vld [vmem:[#allocation2 + $0xc0] sm:$0xff]
    %v108 = vld [vmem:[#allocation2 + $0xc8] sm:$0xff]
    %v109 = vld [vmem:[#allocation2 + $0xd0] sm:$0xff]
    %v110 = vld [vmem:[#allocation2 + $0xd8] sm:$0xff]
    %v111 = vld [vmem:[#allocation2 + $0xe0] sm:$0xff]
    %v112 = vld [vmem:[#allocation2 + $0xe8] sm:$0xff]
    %v113 = vld [vmem:[#allocation2 + $0xf0] sm:$0xff]
    %v114 = vld [vmem:[#allocation2 + $0xf8] sm:$0xff]
    %v115 = vld [vmem:[#allocation2 + $0x100] sm:$0xff]
    %v116 = vld [vmem:[#allocation2 + $0x108] sm:$0xff]
    %v117 = vld [vmem:[#allocation2 + $0x110] sm:$0xff]
    %v118 = vld [vmem:[#allocation2 + $0x118] sm:$0xff]
    %v119 = vld [vmem:[#allocation2 + $0x120] sm:$0xff]
    %v120 = vld [vmem:[#allocation2 + $0x128] sm:$0xff]
    %v121 = vld [vmem:[#allocation2 + $0x130] sm:$0xff]
    %v122 = vld [vmem:[#allocation2 + $0x138] sm:$0xff]
    %v123 = vld [vmem:[#allocation2 + $0x140] sm:$0xff]
    %v124 = vld [vmem:[#allocation2 + $0x148] sm:$0xff]
    %v125 = vld [vmem:[#allocation2 + $0x150] sm:$0xff]
    %v126 = vld [vmem:[#allocation2 + $0x158] sm:$0xff]
    %v127 = vld [vmem:[#allocation2 + $0x160] sm:$0xff]
    %v128 = vld [vmem:[#allocation2 + $0x168] sm:$0xff]
    %v129 = vld [vmem:[#allocation2 + $0x170] sm:$0xff]
    %v130 = vld [vmem:[#allocation2 + $0x178] sm:$0xff]
    %v131 = vld [vmem:[#allocation2 + $0x180] sm:$0xff]
    %v132 = vld [vmem:[#allocation2 + $0x188] sm:$0xff]
    %v133 = vld [vmem:[#allocation2 + $0x190] sm:$0xff]
    %v134 = vld [vmem:[#allocation2 + $0x198] sm:$0xff]
    %v135 = vld [vmem:[#allocation2 + $0x1a0] sm:$0xff]
    %v136 = vld [vmem:[#allocation2 + $0x1a8] sm:$0xff]
    %v137 = vld [vmem:[#allocation2 + $0x1b0] sm:$0xff]
    %v138 = vld [vmem:[#allocation2 + $0x1b8] sm:$0xff]
    %v139 = vld [vmem:[#allocation2 + $0x1c0] sm:$0xff]
    %v140 = vld [vmem:[#allocation2 + $0x1c8] sm:$0xff]
    %v141 = vld [vmem:[#allocation2 + $0x1d0] sm:$0xff]
    %v142 = vld [vmem:[#allocation2 + $0x1d8] sm:$0xff]
    %v143 = vld [vmem:[#allocation2 + $0x1e0] sm:$0xff]
    %v144 = vld [vmem:[#allocation2 + $0x1e8] sm:$0xff]
    %v145 = vld [vmem:[#allocation2 + $0x1f0] sm:$0xff]
    %v146 = vld [vmem:[#allocation2 + $0x1f8] sm:$0xff]
    %v147 = vld [vmem:[#allocation5] sm:$0xff]
    %v148 = vld [vmem:[#allocation5 + $0x8] sm:$0xff]
    %v149 = vld [vmem:[#allocation5 + $0x10] sm:$0xff]
    %v150 = vld [vmem:[#allocation5 + $0x18] sm:$0xff]
    %v151 = vld [vmem:[#allocation5 + $0x20] sm:$0xf]
    %v152 = vld [vmem:[#allocation7] sm:$0x1]
    %v154 = vlaneseq
    %v155 = vshrl.u32 %v154, 7
    %v156 = vsub.s32 0, %v155
    %v157 = vrot.slane %v152, %v156
    %vm159 = vcmask 293888
    %v161 = vsel %vm159, %v83, 0
    %v164 = vsel %vm159, %v84, 0
    %v167 = vsel %vm159, %v85, 0
    %v170 = vsel %vm159, %v86, 0
    %v173 = vsel %vm159, %v87, 0
    %v176 = vsel %vm159, %v88, 0
    %v179 = vsel %vm159, %v89, 0
    %v182 = vsel %vm159, %v90, 0
    %v185 = vsel %vm159, %v91, 0
    %v188 = vsel %vm159, %v92, 0
    %v191 = vsel %vm159, %v93, 0
    %v194 = vsel %vm159, %v94, 0
    %v197 = vsel %vm159, %v95, 0
    %v200 = vsel %vm159, %v96, 0
    %v203 = vsel %vm159, %v97, 0
    %v206 = vsel %vm159, %v98, 0
    %v209 = vsel %vm159, %v99, 0
    %v212 = vsel %vm159, %v100, 0
    %v215 = vsel %vm159, %v101, 0
    %v218 = vsel %vm159, %v102, 0
    %v221 = vsel %vm159, %v103, 0
    %v224 = vsel %vm159, %v104, 0
    %v227 = vsel %vm159, %v105, 0
    %v230 = vsel %vm159, %v106, 0
    %v233 = vsel %vm159, %v107, 0
    %v236 = vsel %vm159, %v108, 0
    %v239 = vsel %vm159, %v109, 0
    %v242 = vsel %vm159, %v110, 0
    %v245 = vsel %vm159, %v111, 0
    %v248 = vsel %vm159, %v112, 0
    %v251 = vsel %vm159, %v113, 0
    %v254 = vsel %vm159, %v114, 0
    %v257 = vsel %vm159, %v115, 0
    %v260 = vsel %vm159, %v116, 0
    %v263 = vsel %vm159, %v117, 0
    %v266 = vsel %vm159, %v118, 0
    %v269 = vsel %vm159, %v119, 0
    %v272 = vsel %vm159, %v120, 0
    %v275 = vsel %vm159, %v121, 0
    %v278 = vsel %vm159, %v122, 0
    %v281 = vsel %vm159, %v123, 0
    %v284 = vsel %vm159, %v124, 0
    %v287 = vsel %vm159, %v125, 0
    %v290 = vsel %vm159, %v126, 0
    %v293 = vsel %vm159, %v127, 0
    %v296 = vsel %vm159, %v128, 0
    %v299 = vsel %vm159, %v129, 0
    %v302 = vsel %vm159, %v130, 0
    %v305 = vsel %vm159, %v131, 0
    %v308 = vsel %vm159, %v132, 0
    %v311 = vsel %vm159, %v133, 0
    %v314 = vsel %vm159, %v134, 0
    %v317 = vsel %vm159, %v135, 0
    %v320 = vsel %vm159, %v136, 0
    %v323 = vsel %vm159, %v137, 0
    %v326 = vsel %vm159, %v138, 0
    %v329 = vsel %vm159, %v139, 0
    %v332 = vsel %vm159, %v140, 0
    %v335 = vsel %vm159, %v141, 0
    %v338 = vsel %vm159, %v142, 0
    %v341 = vsel %vm159, %v143, 0
    %v344 = vsel %vm159, %v144, 0
    %v347 = vsel %vm159, %v145, 0
    %v350 = vsel %vm159, %v146, 0
    %vm352 = vcmask 1043456
    %v354 = vsel %vm352, %v151, 0
    %356 = vmatprep.subr.mxu0 0.0
    %357 = vmatpush1.msra.mxu0 %v147
    %358 = vmatprep.subr.mxu0 0.0
    %359 = vmatpush1.msra.mxu0 %v148
    %360 = vmatprep.subr.mxu0 0.0
    %361 = vmatpush1.msra.mxu0 %v149
    %362 = vmatprep.subr.mxu0 0.0
    %363 = vmatpush1.msra.mxu0 %v150
    %364 = vmatprep.subr.mxu0 0.0
    %365 = vmatpush1.msra.mxu0 %v354
    %366 = vmatprep.subr.mxu0 0.0
    %367 = vmatpush1.msra.mxu0 0.0
    %368 = vmatprep.subr.mxu0 0.0
    %369 = vmatpush1.msra.mxu0 0.0
    %370 = vmatprep.subr.mxu0 0.0
    %371 = vmatpush1.msra.mxu0 0.0
    %372 = vmatprep.subr.mxu0 0.0
    %373 = vmatpush1.msra.mxu0 0.0
    %374 = vmatprep.subr.mxu0 0.0
    %375 = vmatpush1.msra.mxu0 0.0
    %376 = vmatprep.subr.mxu0 0.0
    %377 = vmatpush1.msra.mxu0 0.0
    %378 = vmatprep.subr.mxu0 0.0
    %379 = vmatpush1.msra.mxu0 0.0
    %380 = vmatprep.subr.mxu0 0.0
    %381 = vmatpush1.msra.mxu0 0.0
    %382 = vmatprep.subr.mxu0 0.0
    %383 = vmatpush1.msra.mxu0 0.0
    %384 = vmatprep.subr.mxu0 0.0
    %385 = vmatpush1.msra.mxu0 0.0
    %386 = vmatprep.subr.mxu0 0.0
    %387 = vmatpush1.msra.mxu0 0.0
    %388 = vmatprep.subr.mxu0 0.0
    %389 = vmatpush1.msra.mxu0 0.0
    %390 = vmatprep.subr.mxu0 0.0
    %391 = vmatpush1.msra.mxu0 0.0
    %392 = vmatprep.subr.mxu0 0.0
    %393 = vmatpush1.msra.mxu0 0.0
    %394 = vmatprep.subr.mxu0 0.0
    %395 = vmatpush1.msra.mxu0 0.0
    %396 = vmatprep.subr.mxu0 0.0
    %397 = vmatpush1.msra.mxu0 0.0
    %398 = vmatprep.subr.mxu0 0.0
    %399 = vmatpush1.msra.mxu0 0.0
    %400 = vmatprep.subr.mxu0 0.0
    %401 = vmatpush1.msra.mxu0 0.0
    %402 = vmatprep.subr.mxu0 0.0
    %403 = vmatpush1.msra.mxu0 0.0
    %404 = vmatprep.subr.mxu0 0.0
    %405 = vmatpush1.msra.mxu0 0.0
    %406 = vmatprep.subr.mxu0 0.0
    %407 = vmatpush1.msra.mxu0 0.0
    %408 = vmatprep.subr.mxu0 0.0
    %409 = vmatpush1.msra.mxu0 0.0
    %410 = vmatprep.subr.mxu0 0.0
    %411 = vmatpush1.msra.mxu0 0.0
    %412 = vmatprep.subr.mxu0 0.0
    %413 = vmatpush1.msra.mxu0 0.0
    %414 = vmatprep.subr.mxu0 0.0
    %415 = vmatpush1.msra.mxu0 0.0
    %416 = vmatprep.subr.mxu0 0.0
    %417 = vmatpush1.msra.mxu0 0.0
    %418 = vmatprep.subr.mxu0 0.0
    %419 = vmatpush1.msra.mxu0 0.0
    %420 = vmatprep.mubr.f32.mxu0 0.0
    %421 = vmatmul.mubr.f32.gmra.mrb[0].mxu0 %v161
    %v422 = vpop.f32.mrb[0].mxu0
    %v423 = vadd.f32 %v157, %v422
    %v424 = vpop.f32.mrb[0].mxu0
    %425 = vmatprep.mubr.f32.mxu0 0.0
    %426 = vmatmul.mubr.f32.gmra.mrb[0].mxu0 %v164
    %v427 = vpop.f32.mrb[0].mxu0
    %v428 = vadd.f32 %v157, %v427
    %v429 = vpop.f32.mrb[0].mxu0
    %430 = vmatprep.mubr.f32.mxu0 0.0
    %431 = vmatmul.mubr.f32.gmra.mrb[0].mxu0 %v167
    %v432 = vpop.f32.mrb[0].mxu0
    %v433 = vadd.f32 %v157, %v432
    %v434 = vpop.f32.mrb[0].mxu0
    %435 = vmatprep.mubr.f32.mxu0 0.0
    %436 = vmatmul.mubr.f32.gmra.mrb[0].mxu0 %v170
    %v437 = vpop.f32.mrb[0].mxu0
    %v438 = vadd.f32 %v157, %v437
    %v439 = vpop.f32.mrb[0].mxu0
    %440 = vmatprep.mubr.f32.mxu0 0.0
    %441 = vmatmul.mubr.f32.gmra.mrb[0].mxu0 %v173
    %v442 = vpop.f32.mrb[0].mxu0
    %v443 = vadd.f32 %v157, %v442
    %v444 = vpop.f32.mrb[0].mxu0
    %445 = vmatprep.mubr.f32.mxu0 0.0
    %446 = vmatmul.mubr.f32.gmra.mrb[0].mxu0 %v176
    %v447 = vpop.f32.mrb[0].mxu0
    %v448 = vadd.f32 %v157, %v447
    %v449 = vpop.f32.mrb[0].mxu0
    %450 = vmatprep.mubr.f32.mxu0 0.0
    %451 = vmatmul.mubr.f32.gmra.mrb[0].mxu0 %v179
    %v452 = vpop.f32.mrb[0].mxu0
    %v453 = vadd.f32 %v157, %v452
    %v454 = vpop.f32.mrb[0].mxu0
    %455 = vmatprep.mubr.f32.mxu0 0.0
    %456 = vmatmul.mubr.f32.gmra.mrb[0].mxu0 %v182
    %v457 = vpop.f32.mrb[0].mxu0
    %v458 = vadd.f32 %v157, %v457
    %v459 = vpop.f32.mrb[0].mxu0
    %460 = vmatprep.mubr.f32.mxu0 0.0
    %461 = vmatmul.mubr.f32.gmra.mrb[0].mxu0 %v185
    %v462 = vpop.f32.mrb[0].mxu0
    %v463 = vadd.f32 %v157, %v462
    %v464 = vpop.f32.mrb[0].mxu0
    %465 = vmatprep.mubr.f32.mxu0 0.0
    %466 = vmatmul.mubr.f32.gmra.mrb[0].mxu0 %v188
    %v467 = vpop.f32.mrb[0].mxu0
    %v468 = vadd.f32 %v157, %v467
    %v469 = vpop.f32.mrb[0].mxu0
    %470 = vmatprep.mubr.f32.mxu0 0.0
    %471 = vmatmul.mubr.f32.gmra.mrb[0].mxu0 %v191
    %v472 = vpop.f32.mrb[0].mxu0
    %v473 = vadd.f32 %v157, %v472
    %v474 = vpop.f32.mrb[0].mxu0
    %475 = vmatprep.mubr.f32.mxu0 0.0
    %476 = vmatmul.mubr.f32.gmra.mrb[0].mxu0 %v194
    %v477 = vpop.f32.mrb[0].mxu0
    %v478 = vadd.f32 %v157, %v477
    %v479 = vpop.f32.mrb[0].mxu0
    %480 = vmatprep.mubr.f32.mxu0 0.0
    %481 = vmatmul.mubr.f32.gmra.mrb[0].mxu0 %v197
    %v482 = vpop.f32.mrb[0].mxu0
    %v483 = vadd.f32 %v157, %v482
    %v484 = vpop.f32.mrb[0].mxu0
    %485 = vmatprep.mubr.f32.mxu0 0.0
    %486 = vmatmul.mubr.f32.gmra.mrb[0].mxu0 %v200
    %v487 = vpop.f32.mrb[0].mxu0
    %v488 = vadd.f32 %v157, %v487
    %v489 = vpop.f32.mrb[0].mxu0
    %490 = vmatprep.mubr.f32.mxu0 0.0
    %491 = vmatmul.mubr.f32.gmra.mrb[0].mxu0 %v203
    %v492 = vpop.f32.mrb[0].mxu0
    %v493 = vadd.f32 %v157, %v492
    %v494 = vpop.f32.mrb[0].mxu0
    %495 = vmatprep.mubr.f32.mxu0 0.0
    %496 = vmatmul.mubr.f32.gmra.mrb[0].mxu0 %v206
    %v497 = vpop.f32.mrb[0].mxu0
    %v498 = vadd.f32 %v157, %v497
    %v499 = vpop.f32.mrb[0].mxu0
    %500 = vmatprep.mubr.f32.mxu0 0.0
    %501 = vmatmul.mubr.f32.gmra.mrb[0].mxu0 %v209
    %v502 = vpop.f32.mrb[0].mxu0
    %v503 = vadd.f32 %v157, %v502
    %v504 = vpop.f32.mrb[0].mxu0
    %505 = vmatprep.mubr.f32.mxu0 0.0
    %506 = vmatmul.mubr.f32.gmra.mrb[0].mxu0 %v212
    %v507 = vpop.f32.mrb[0].mxu0
    %v508 = vadd.f32 %v157, %v507
    %v509 = vpop.f32.mrb[0].mxu0
    %510 = vmatprep.mubr.f32.mxu0 0.0
    %511 = vmatmul.mubr.f32.gmra.mrb[0].mxu0 %v215
    %v512 = vpop.f32.mrb[0].mxu0
    %v513 = vadd.f32 %v157, %v512
    %v514 = vpop.f32.mrb[0].mxu0
    %515 = vmatprep.mubr.f32.mxu0 0.0
    %516 = vmatmul.mubr.f32.gmra.mrb[0].mxu0 %v218
    %v517 = vpop.f32.mrb[0].mxu0
    %v518 = vadd.f32 %v157, %v517
    %v519 = vpop.f32.mrb[0].mxu0
    %520 = vmatprep.mubr.f32.mxu0 0.0
    %521 = vmatmul.mubr.f32.gmra.mrb[0].mxu0 %v221
    %v522 = vpop.f32.mrb[0].mxu0
    %v523 = vadd.f32 %v157, %v522
    %v524 = vpop.f32.mrb[0].mxu0
    %525 = vmatprep.mubr.f32.mxu0 0.0
    %526 = vmatmul.mubr.f32.gmra.mrb[0].mxu0 %v224
    %v527 = vpop.f32.mrb[0].mxu0
    %v528 = vadd.f32 %v157, %v527
    %v529 = vpop.f32.mrb[0].mxu0
    %530 = vmatprep.mubr.f32.mxu0 0.0
    %531 = vmatmul.mubr.f32.gmra.mrb[0].mxu0 %v227
    %v532 = vpop.f32.mrb[0].mxu0
    %v533 = vadd.f32 %v157, %v532
    %v534 = vpop.f32.mrb[0].mxu0
    %535 = vmatprep.mubr.f32.mxu0 0.0
    %536 = vmatmul.mubr.f32.gmra.mrb[0].mxu0 %v230
    %v537 = vpop.f32.mrb[0].mxu0
    %v538 = vadd.f32 %v157, %v537
    %v539 = vpop.f32.mrb[0].mxu0
    %540 = vmatprep.mubr.f32.mxu0 0.0
    %541 = vmatmul.mubr.f32.gmra.mrb[0].mxu0 %v233
    %v542 = vpop.f32.mrb[0].mxu0
    %v543 = vadd.f32 %v157, %v542
    %v544 = vpop.f32.mrb[0].mxu0
    %545 = vmatprep.mubr.f32.mxu0 0.0
    %546 = vmatmul.mubr.f32.gmra.mrb[0].mxu0 %v236
    %v547 = vpop.f32.mrb[0].mxu0
    %v548 = vadd.f32 %v157, %v547
    %v549 = vpop.f32.mrb[0].mxu0
    %550 = vmatprep.mubr.f32.mxu0 0.0
    %551 = vmatmul.mubr.f32.gmra.mrb[0].mxu0 %v239
    %v552 = vpop.f32.mrb[0].mxu0
    %v553 = vadd.f32 %v157, %v552
    %v554 = vpop.f32.mrb[0].mxu0
    %555 = vmatprep.mubr.f32.mxu0 0.0
    %556 = vmatmul.mubr.f32.gmra.mrb[0].mxu0 %v242
    %v557 = vpop.f32.mrb[0].mxu0
    %v558 = vadd.f32 %v157, %v557
    %v559 = vpop.f32.mrb[0].mxu0
    %560 = vmatprep.mubr.f32.mxu0 0.0
    %561 = vmatmul.mubr.f32.gmra.mrb[0].mxu0 %v245
    %v562 = vpop.f32.mrb[0].mxu0
    %v563 = vadd.f32 %v157, %v562
    %v564 = vpop.f32.mrb[0].mxu0
    %565 = vmatprep.mubr.f32.mxu0 0.0
    %566 = vmatmul.mubr.f32.gmra.mrb[0].mxu0 %v248
    %v567 = vpop.f32.mrb[0].mxu0
    %v568 = vadd.f32 %v157, %v567
    %v569 = vpop.f32.mrb[0].mxu0
    %570 = vmatprep.mubr.f32.mxu0 0.0
    %571 = vmatmul.mubr.f32.gmra.mrb[0].mxu0 %v251
    %v572 = vpop.f32.mrb[0].mxu0
    %v573 = vadd.f32 %v157, %v572
    %v574 = vpop.f32.mrb[0].mxu0
    %575 = vmatprep.mubr.f32.mxu0 0.0
    %576 = vmatmul.mubr.f32.gmra.mrb[0].mxu0 %v254
    %v577 = vpop.f32.mrb[0].mxu0
    %v578 = vadd.f32 %v157, %v577
    %v579 = vpop.f32.mrb[0].mxu0
    %580 = vmatprep.mubr.f32.mxu0 0.0
    %581 = vmatmul.mubr.f32.gmra.mrb[0].mxu0 %v257
    %v582 = vpop.f32.mrb[0].mxu0
    %v583 = vadd.f32 %v157, %v582
    %v584 = vpop.f32.mrb[0].mxu0
    %585 = vmatprep.mubr.f32.mxu0 0.0
    %586 = vmatmul.mubr.f32.gmra.mrb[0].mxu0 %v260
    %v587 = vpop.f32.mrb[0].mxu0
    %v588 = vadd.f32 %v157, %v587
    %v589 = vpop.f32.mrb[0].mxu0
    %590 = vmatprep.mubr.f32.mxu0 0.0
    %591 = vmatmul.mubr.f32.gmra.mrb[0].mxu0 %v263
    %v592 = vpop.f32.mrb[0].mxu0
    %v593 = vadd.f32 %v157, %v592
    %v594 = vpop.f32.mrb[0].mxu0
    %595 = vmatprep.mubr.f32.mxu0 0.0
    %596 = vmatmul.mubr.f32.gmra.mrb[0].mxu0 %v266
    %v597 = vpop.f32.mrb[0].mxu0
    %v598 = vadd.f32 %v157, %v597
    %v599 = vpop.f32.mrb[0].mxu0
    %600 = vmatprep.mubr.f32.mxu0 0.0
    %601 = vmatmul.mubr.f32.gmra.mrb[0].mxu0 %v269
    %v602 = vpop.f32.mrb[0].mxu0
    %v603 = vadd.f32 %v157, %v602
    %v604 = vpop.f32.mrb[0].mxu0
    %605 = vmatprep.mubr.f32.mxu0 0.0
    %606 = vmatmul.mubr.f32.gmra.mrb[0].mxu0 %v272
    %v607 = vpop.f32.mrb[0].mxu0
    %v608 = vadd.f32 %v157, %v607
    %v609 = vpop.f32.mrb[0].mxu0
    %610 = vmatprep.mubr.f32.mxu0 0.0
    %611 = vmatmul.mubr.f32.gmra.mrb[0].mxu0 %v275
    %v612 = vpop.f32.mrb[0].mxu0
    %v613 = vadd.f32 %v157, %v612
    %v614 = vpop.f32.mrb[0].mxu0
    %615 = vmatprep.mubr.f32.mxu0 0.0
    %616 = vmatmul.mubr.f32.gmra.mrb[0].mxu0 %v278
    %v617 = vpop.f32.mrb[0].mxu0
    %v618 = vadd.f32 %v157, %v617
    %v619 = vpop.f32.mrb[0].mxu0
    %620 = vmatprep.mubr.f32.mxu0 0.0
    %621 = vmatmul.mubr.f32.gmra.mrb[0].mxu0 %v281
    %v622 = vpop.f32.mrb[0].mxu0
    %v623 = vadd.f32 %v157, %v622
    %v624 = vpop.f32.mrb[0].mxu0
    %625 = vmatprep.mubr.f32.mxu0 0.0
    %626 = vmatmul.mubr.f32.gmra.mrb[0].mxu0 %v284
    %v627 = vpop.f32.mrb[0].mxu0
    %v628 = vadd.f32 %v157, %v627
    %v629 = vpop.f32.mrb[0].mxu0
    %630 = vmatprep.mubr.f32.mxu0 0.0
    %631 = vmatmul.mubr.f32.gmra.mrb[0].mxu0 %v287
    %v632 = vpop.f32.mrb[0].mxu0
    %v633 = vadd.f32 %v157, %v632
    %v634 = vpop.f32.mrb[0].mxu0
    %635 = vmatprep.mubr.f32.mxu0 0.0
    %636 = vmatmul.mubr.f32.gmra.mrb[0].mxu0 %v290
    %v637 = vpop.f32.mrb[0].mxu0
    %v638 = vadd.f32 %v157, %v637
    %v639 = vpop.f32.mrb[0].mxu0
    %640 = vmatprep.mubr.f32.mxu0 0.0
    %641 = vmatmul.mubr.f32.gmra.mrb[0].mxu0 %v293
    %v642 = vpop.f32.mrb[0].mxu0
    %v643 = vadd.f32 %v157, %v642
    %v644 = vpop.f32.mrb[0].mxu0
    %645 = vmatprep.mubr.f32.mxu0 0.0
    %646 = vmatmul.mubr.f32.gmra.mrb[0].mxu0 %v296
    %v647 = vpop.f32.mrb[0].mxu0
    %v648 = vadd.f32 %v157, %v647
    %v649 = vpop.f32.mrb[0].mxu0
    %650 = vmatprep.mubr.f32.mxu0 0.0
    %651 = vmatmul.mubr.f32.gmra.mrb[0].mxu0 %v299
    %v652 = vpop.f32.mrb[0].mxu0
    %v653 = vadd.f32 %v157, %v652
    %v654 = vpop.f32.mrb[0].mxu0
    %655 = vmatprep.mubr.f32.mxu0 0.0
    %656 = vmatmul.mubr.f32.gmra.mrb[0].mxu0 %v302
    %v657 = vpop.f32.mrb[0].mxu0
    %v658 = vadd.f32 %v157, %v657
    %v659 = vpop.f32.mrb[0].mxu0
    %660 = vmatprep.mubr.f32.mxu0 0.0
    %661 = vmatmul.mubr.f32.gmra.mrb[0].mxu0 %v305
    %v662 = vpop.f32.mrb[0].mxu0
    %v663 = vadd.f32 %v157, %v662
    %v664 = vpop.f32.mrb[0].mxu0
    %665 = vmatprep.mubr.f32.mxu0 0.0
    %666 = vmatmul.mubr.f32.gmra.mrb[0].mxu0 %v308
    %v667 = vpop.f32.mrb[0].mxu0
    %v668 = vadd.f32 %v157, %v667
    %v669 = vpop.f32.mrb[0].mxu0
    %670 = vmatprep.mubr.f32.mxu0 0.0
    %671 = vmatmul.mubr.f32.gmra.mrb[0].mxu0 %v311
    %v672 = vpop.f32.mrb[0].mxu0
    %v673 = vadd.f32 %v157, %v672
    %v674 = vpop.f32.mrb[0].mxu0
    %675 = vmatprep.mubr.f32.mxu0 0.0
    %676 = vmatmul.mubr.f32.gmra.mrb[0].mxu0 %v314
    %v677 = vpop.f32.mrb[0].mxu0
    %v678 = vadd.f32 %v157, %v677
    %v679 = vpop.f32.mrb[0].mxu0
    %680 = vmatprep.mubr.f32.mxu0 0.0
    %681 = vmatmul.mubr.f32.gmra.mrb[0].mxu0 %v317
    %v682 = vpop.f32.mrb[0].mxu0
    %v683 = vadd.f32 %v157, %v682
    %v684 = vpop.f32.mrb[0].mxu0
    %685 = vmatprep.mubr.f32.mxu0 0.0
    %686 = vmatmul.mubr.f32.gmra.mrb[0].mxu0 %v320
    %v687 = vpop.f32.mrb[0].mxu0
    %v688 = vadd.f32 %v157, %v687
    %v689 = vpop.f32.mrb[0].mxu0
    %690 = vmatprep.mubr.f32.mxu0 0.0
    %691 = vmatmul.mubr.f32.gmra.mrb[0].mxu0 %v323
    %v692 = vpop.f32.mrb[0].mxu0
    %v693 = vadd.f32 %v157, %v692
    %v694 = vpop.f32.mrb[0].mxu0
    %695 = vmatprep.mubr.f32.mxu0 0.0
    %696 = vmatmul.mubr.f32.gmra.mrb[0].mxu0 %v326
    %v697 = vpop.f32.mrb[0].mxu0
    %v698 = vadd.f32 %v157, %v697
    %v699 = vpop.f32.mrb[0].mxu0
    %700 = vmatprep.mubr.f32.mxu0 0.0
    %701 = vmatmul.mubr.f32.gmra.mrb[0].mxu0 %v329
    %v702 = vpop.f32.mrb[0].mxu0
    %v703 = vadd.f32 %v157, %v702
    %v704 = vpop.f32.mrb[0].mxu0
    %705 = vmatprep.mubr.f32.mxu0 0.0
    %706 = vmatmul.mubr.f32.gmra.mrb[0].mxu0 %v332
    %v707 = vpop.f32.mrb[0].mxu0
    %v708 = vadd.f32 %v157, %v707
    %v709 = vpop.f32.mrb[0].mxu0
    %710 = vmatprep.mubr.f32.mxu0 0.0
    %711 = vmatmul.mubr.f32.gmra.mrb[0].mxu0 %v335
    %v712 = vpop.f32.mrb[0].mxu0
    %v713 = vadd.f32 %v157, %v712
    %v714 = vpop.f32.mrb[0].mxu0
    %715 = vmatprep.mubr.f32.mxu0 0.0
    %716 = vmatmul.mubr.f32.gmra.mrb[0].mxu0 %v338
    %v717 = vpop.f32.mrb[0].mxu0
    %v718 = vadd.f32 %v157, %v717
    %v719 = vpop.f32.mrb[0].mxu0
    %720 = vmatprep.mubr.f32.mxu0 0.0
    %721 = vmatmul.mubr.f32.gmra.mrb[0].mxu0 %v341
    %v722 = vpop.f32.mrb[0].mxu0
    %v723 = vadd.f32 %v157, %v722
    %v724 = vpop.f32.mrb[0].mxu0
    %725 = vmatprep.mubr.f32.mxu0 0.0
    %726 = vmatmul.mubr.f32.gmra.mrb[0].mxu0 %v344
    %v727 = vpop.f32.mrb[0].mxu0
    %v728 = vadd.f32 %v157, %v727
    %v729 = vpop.f32.mrb[0].mxu0
    %730 = vmatprep.mubr.f32.mxu0 0.0
    %731 = vmatmul.mubr.f32.gmra.mrb[0].mxu0 %v347
    %v732 = vpop.f32.mrb[0].mxu0
    %v733 = vadd.f32 %v157, %v732
    %v734 = vpop.f32.mrb[0].mxu0
    %735 = vmatprep.mubr.f32.mxu0 0.0
    %736 = vmatmul.mubr.f32.gmra.mrb[0].mxu0 %v350
    %v737 = vpop.f32.mrb[0].mxu0
    %v738 = vadd.f32 %v157, %v737
    %v739 = vpop.f32.mrb[0].mxu0
    %740 = vdwg.mxu0
    %v741 = vmax.f32 %v423, 0.0
    %v742 = vmax.f32 %v428, 0.0
    %v743 = vmax.f32 %v433, 0.0
    %v744 = vmax.f32 %v438, 0.0
    %v745 = vmax.f32 %v443, 0.0
    %v746 = vmax.f32 %v448, 0.0
    %v747 = vmax.f32 %v453, 0.0
    %v748 = vmax.f32 %v458, 0.0
    %v749 = vmax.f32 %v463, 0.0
    %v750 = vmax.f32 %v468, 0.0
    %v751 = vmax.f32 %v473, 0.0
    %v752 = vmax.f32 %v478, 0.0
    %v753 = vmax.f32 %v483, 0.0
    %v754 = vmax.f32 %v488, 0.0
    %v755 = vmax.f32 %v493, 0.0
    %v756 = vmax.f32 %v498, 0.0
    %v757 = vmax.f32 %v503, 0.0
    %v758 = vmax.f32 %v508, 0.0
    %v759 = vmax.f32 %v513, 0.0
    %v760 = vmax.f32 %v518, 0.0
    %v761 = vmax.f32 %v523, 0.0
    %v762 = vmax.f32 %v528, 0.0
    %v763 = vmax.f32 %v533, 0.0
    %v764 = vmax.f32 %v538, 0.0
    %v765 = vmax.f32 %v543, 0.0
    %v766 = vmax.f32 %v548, 0.0
    %v767 = vmax.f32 %v553, 0.0
    %v768 = vmax.f32 %v558, 0.0
    %v769 = vmax.f32 %v563, 0.0
    %v770 = vmax.f32 %v568, 0.0
    %v771 = vmax.f32 %v573, 0.0
    %v772 = vmax.f32 %v578, 0.0
    %v773 = vmax.f32 %v583, 0.0
    %v774 = vmax.f32 %v588, 0.0
    %v775 = vmax.f32 %v593, 0.0
    %v776 = vmax.f32 %v598, 0.0
    %v777 = vmax.f32 %v603, 0.0
    %v778 = vmax.f32 %v608, 0.0
    %v779 = vmax.f32 %v613, 0.0
    %v780 = vmax.f32 %v618, 0.0
    %v781 = vmax.f32 %v623, 0.0
    %v782 = vmax.f32 %v628, 0.0
    %v783 = vmax.f32 %v633, 0.0
    %v784 = vmax.f32 %v638, 0.0
    %v785 = vmax.f32 %v643, 0.0
    %v786 = vmax.f32 %v648, 0.0
    %v787 = vmax.f32 %v653, 0.0
    %v788 = vmax.f32 %v658, 0.0
    %v789 = vmax.f32 %v663, 0.0
    %v790 = vmax.f32 %v668, 0.0
    %v791 = vmax.f32 %v673, 0.0
    %v792 = vmax.f32 %v678, 0.0
    %v793 = vmax.f32 %v683, 0.0
    %v794 = vmax.f32 %v688, 0.0
    %v795 = vmax.f32 %v693, 0.0
    %v796 = vmax.f32 %v698, 0.0
    %v797 = vmax.f32 %v703, 0.0
    %v798 = vmax.f32 %v708, 0.0
    %v799 = vmax.f32 %v713, 0.0
    %v800 = vmax.f32 %v718, 0.0
    %v801 = vmax.f32 %v723, 0.0
    %v802 = vmax.f32 %v728, 0.0
    %v803 = vmax.f32 %v733, 0.0
    %v804 = vmax.f32 %v738, 0.0
    %vm805 = vcmask 64512
    %v806 = vsel %vm805, %v741, 0.0
    %v807 = vsel %vm805, %v742, 0.0
    %v808 = vadd.f32 %v806, %v807
    %v809 = vsel %vm805, %v743, 0.0
    %v810 = vadd.f32 %v808, %v809
    %v811 = vsel %vm805, %v744, 0.0
    %v812 = vadd.f32 %v810, %v811
    %v813 = vsel %vm805, %v745, 0.0
    %v814 = vadd.f32 %v812, %v813
    %v815 = vsel %vm805, %v746, 0.0
    %v816 = vadd.f32 %v814, %v815
    %v817 = vsel %vm805, %v747, 0.0
    %v818 = vadd.f32 %v816, %v817
    %v819 = vsel %vm805, %v748, 0.0
    %v820 = vadd.f32 %v818, %v819
    %v821 = vsel %vm805, %v749, 0.0
    %v822 = vadd.f32 %v820, %v821
    %v823 = vsel %vm805, %v750, 0.0
    %v824 = vadd.f32 %v822, %v823
    %v825 = vsel %vm805, %v751, 0.0
    %v826 = vadd.f32 %v824, %v825
    %v827 = vsel %vm805, %v752, 0.0
    %v828 = vadd.f32 %v826, %v827
    %v829 = vsel %vm805, %v753, 0.0
    %v830 = vadd.f32 %v828, %v829
    %v831 = vsel %vm805, %v754, 0.0
    %v832 = vadd.f32 %v830, %v831
    %v833 = vsel %vm805, %v755, 0.0
    %v834 = vadd.f32 %v832, %v833
    %v835 = vsel %vm805, %v756, 0.0
    %v836 = vadd.f32 %v834, %v835
    %v837 = vsel %vm805, %v757, 0.0
    %v838 = vadd.f32 %v836, %v837
    %v839 = vsel %vm805, %v758, 0.0
    %v840 = vadd.f32 %v838, %v839
    %v841 = vsel %vm805, %v759, 0.0
    %v842 = vadd.f32 %v840, %v841
    %v843 = vsel %vm805, %v760, 0.0
    %v844 = vadd.f32 %v842, %v843
    %v845 = vsel %vm805, %v761, 0.0
    %v846 = vadd.f32 %v844, %v845
    %v847 = vsel %vm805, %v762, 0.0
    %v848 = vadd.f32 %v846, %v847
    %v849 = vsel %vm805, %v763, 0.0
    %v850 = vadd.f32 %v848, %v849
    %v851 = vsel %vm805, %v764, 0.0
    %v852 = vadd.f32 %v850, %v851
    %v853 = vsel %vm805, %v765, 0.0
    %v854 = vadd.f32 %v852, %v853
    %v855 = vsel %vm805, %v766, 0.0
    %v856 = vadd.f32 %v854, %v855
    %v857 = vsel %vm805, %v767, 0.0
    %v858 = vadd.f32 %v856, %v857
    %v859 = vsel %vm805, %v768, 0.0
    %v860 = vadd.f32 %v858, %v859
    %v861 = vsel %vm805, %v769, 0.0
    %v862 = vadd.f32 %v860, %v861
    %v863 = vsel %vm805, %v770, 0.0
    %v864 = vadd.f32 %v862, %v863
    %v865 = vsel %vm805, %v771, 0.0
    %v866 = vadd.f32 %v864, %v865
    %v867 = vsel %vm805, %v772, 0.0
    %v868 = vadd.f32 %v866, %v867
    %v869 = vrot.slane %v868, 4
    %v870 = vadd.f32 %v868, %v869
    %v871 = vrot.slane %v870, 2
    %v872 = vadd.f32 %v870, %v871
    %v873 = vrot.slane %v872, 1
    %v874 = vadd.f32 %v872, %v873
    %v875 = vsel %vm805, %v773, 0.0
    %v876 = vsel %vm805, %v774, 0.0
    %v877 = vadd.f32 %v875, %v876
    %v878 = vsel %vm805, %v775, 0.0
    %v879 = vadd.f32 %v877, %v878
    %v880 = vsel %vm805, %v776, 0.0
    %v881 = vadd.f32 %v879, %v880
    %v882 = vsel %vm805, %v777, 0.0
    %v883 = vadd.f32 %v881, %v882
    %v884 = vsel %vm805, %v778, 0.0
    %v885 = vadd.f32 %v883, %v884
    %v886 = vsel %vm805, %v779, 0.0
    %v887 = vadd.f32 %v885, %v886
    %v888 = vsel %vm805, %v780, 0.0
    %v889 = vadd.f32 %v887, %v888
    %v890 = vsel %vm805, %v781, 0.0
    %v891 = vadd.f32 %v889, %v890
    %v892 = vsel %vm805, %v782, 0.0
    %v893 = vadd.f32 %v891, %v892
    %v894 = vsel %vm805, %v783, 0.0
    %v895 = vadd.f32 %v893, %v894
    %v896 = vsel %vm805, %v784, 0.0
    %v897 = vadd.f32 %v895, %v896
    %v898 = vsel %vm805, %v785, 0.0
    %v899 = vadd.f32 %v897, %v898
    %v900 = vsel %vm805, %v786, 0.0
    %v901 = vadd.f32 %v899, %v900
    %v902 = vsel %vm805, %v787, 0.0
    %v903 = vadd.f32 %v901, %v902
    %v904 = vsel %vm805, %v788, 0.0
    %v905 = vadd.f32 %v903, %v904
    %v906 = vsel %vm805, %v789, 0.0
    %v907 = vadd.f32 %v905, %v906
    %v908 = vsel %vm805, %v790, 0.0
    %v909 = vadd.f32 %v907, %v908
    %v910 = vsel %vm805, %v791, 0.0
    %v911 = vadd.f32 %v909, %v910
    %v912 = vsel %vm805, %v792, 0.0
    %v913 = vadd.f32 %v911, %v912
    %v914 = vsel %vm805, %v793, 0.0
    %v915 = vadd.f32 %v913, %v914
    %v916 = vsel %vm805, %v794, 0.0
    %v917 = vadd.f32 %v915, %v916
    %v918 = vsel %vm805, %v795, 0.0
    %v919 = vadd.f32 %v917, %v918
    %v920 = vsel %vm805, %v796, 0.0
    %v921 = vadd.f32 %v919, %v920
    %v922 = vsel %vm805, %v797, 0.0
    %v923 = vadd.f32 %v921, %v922
    %v924 = vsel %vm805, %v798, 0.0
    %v925 = vadd.f32 %v923, %v924
    %v926 = vsel %vm805, %v799, 0.0
    %v927 = vadd.f32 %v925, %v926
    %v928 = vsel %vm805, %v800, 0.0
    %v929 = vadd.f32 %v927, %v928
    %v930 = vsel %vm805, %v801, 0.0
    %v931 = vadd.f32 %v929, %v930
    %v932 = vsel %vm805, %v802, 0.0
    %v933 = vadd.f32 %v931, %v932
    %v934 = vsel %vm805, %v803, 0.0
    %v935 = vadd.f32 %v933, %v934
    %v936 = vsel %vm805, %v804, 0.0
    %v937 = vadd.f32 %v935, %v936
    %v938 = vrot.slane %v937, 4
    %v939 = vadd.f32 %v937, %v938
    %v940 = vrot.slane %v939, 2
    %v941 = vadd.f32 %v939, %v940
    %v942 = vrot.slane %v941, 1
    %v943 = vadd.f32 %v941, %v942
    %v944 = vrcp.pop 256.0
    %v945 = vmul.f32 %v874, %v944
    %v946 = vmul.f32 %v943, %v944
    %v947 = vld [vmem:[#allocation8] sm:$0xff]
    %v948 = vld [vmem:[#allocation10] sm:$0x1]
    %v950 = vlaneseq
    %v951 = vshrl.u32 %v950, 7
    %v952 = vsub.s32 0, %v951
    %v953 = vrot.slane %v948, %v952
    %vm957 = vcmask 1041409
    %v958 = vsel %vm957, %v946, %v945
    %v959 = vsel %vm805, %v958, 0
    %961 = vmatprep.subr.mxu0 0.0
    %962 = vmatpush1.msra.mxu0 %v947
    %963 = vmatprep.subr.mxu0 0.0
    %964 = vmatpush1.msra.mxu0 0.0
    %965 = vmatprep.subr.mxu0 0.0
    %966 = vmatpush1.msra.mxu0 0.0
    %967 = vmatprep.subr.mxu0 0.0
    %968 = vmatpush1.msra.mxu0 0.0
    %969 = vmatprep.subr.mxu0 0.0
    %970 = vmatpush1.msra.mxu0 0.0
    %971 = vmatprep.subr.mxu0 0.0
    %972 = vmatpush1.msra.mxu0 0.0
    %973 = vmatprep.subr.mxu0 0.0
    %974 = vmatpush1.msra.mxu0 0.0
    %975 = vmatprep.subr.mxu0 0.0
    %976 = vmatpush1.msra.mxu0 0.0
    %977 = vmatprep.subr.mxu0 0.0
    %978 = vmatpush1.msra.mxu0 0.0
    %979 = vmatprep.subr.mxu0 0.0
    %980 = vmatpush1.msra.mxu0 0.0
    %981 = vmatprep.subr.mxu0 0.0
    %982 = vmatpush1.msra.mxu0 0.0
    %983 = vmatprep.subr.mxu0 0.0
    %984 = vmatpush1.msra.mxu0 0.0
    %985 = vmatprep.subr.mxu0 0.0
    %986 = vmatpush1.msra.mxu0 0.0
    %987 = vmatprep.subr.mxu0 0.0
    %988 = vmatpush1.msra.mxu0 0.0
    %989 = vmatprep.subr.mxu0 0.0
    %990 = vmatpush1.msra.mxu0 0.0
    %991 = vmatprep.subr.mxu0 0.0
    %992 = vmatpush1.msra.mxu0 0.0
    %993 = vmatprep.subr.mxu0 0.0
    %994 = vmatpush1.msra.mxu0 0.0
    %995 = vmatprep.subr.mxu0 0.0
    %996 = vmatpush1.msra.mxu0 0.0
    %997 = vmatprep.subr.mxu0 0.0
    %998 = vmatpush1.msra.mxu0 0.0
    %999 = vmatprep.subr.mxu0 0.0
    %1000 = vmatpush1.msra.mxu0 0.0
    %1001 = vmatprep.subr.mxu0 0.0
    %1002 = vmatpush1.msra.mxu0 0.0
    %1003 = vmatprep.subr.mxu0 0.0
    %1004 = vmatpush1.msra.mxu0 0.0
    %1005 = vmatprep.subr.mxu0 0.0
    %1006 = vmatpush1.msra.mxu0 0.0
    %1007 = vmatprep.subr.mxu0 0.0
    %1008 = vmatpush1.msra.mxu0 0.0
    %1009 = vmatprep.subr.mxu0 0.0
    %1010 = vmatpush1.msra.mxu0 0.0
    %1011 = vmatprep.subr.mxu0 0.0
    %1012 = vmatpush1.msra.mxu0 0.0
    %1013 = vmatprep.subr.mxu0 0.0
    %1014 = vmatpush1.msra.mxu0 0.0
    %1015 = vmatprep.subr.mxu0 0.0
    %1016 = vmatpush1.msra.mxu0 0.0
    %1017 = vmatprep.subr.mxu0 0.0
    %1018 = vmatpush1.msra.mxu0 0.0
    %1019 = vmatprep.subr.mxu0 0.0
    %1020 = vmatpush1.msra.mxu0 0.0
    %1021 = vmatprep.subr.mxu0 0.0
    %1022 = vmatpush1.msra.mxu0 0.0
    %1023 = vmatprep.subr.mxu0 0.0
    %1024 = vmatpush1.msra.mxu0 0.0
    %1025 = vmatprep.mubr.f32.mxu0 0.0
    %1026 = vmatmul.mubr.f32.gmra.mrb[0].mxu0 %v959
    %v1027 = vpop.f32.mrb[0].mxu0
    %v1028 = vadd.f32 %v953, %v1027
    %v1029 = vpop.f32.mrb[0].mxu0
    %1030 = vdwg.mxu0
    %1031 = vst [vmem:[#allocation11] sm:$0x3] %v1028
    // Predicated region
    $region42: #{tpu_custom_call.1} parent=1 // pred_check
      _
    $region43: #{tpu_custom_call.1} parent=1 // pred_check_branch
      %1033 = sbr.rel (0) target = $region45
    $region44: #{tpu_custom_call.1} parent=1 // pred_region
      %s1035 = ssub.s32 32, 32
      %1036 = vsyncadd [#allocation4], %s1035
      %s1038 = sshll.u32 [#allocation11], 4
      %s1039 = int_to_ptr.vmem [resolvable:$true] %s1038
      %1041 = dma.vmem_to_hbm [thread:$0]  %s1039, 32, %s5, [#allocation4]
    $region45: #{tpu_custom_call.1} parent=1 // pred_fallthru
      _
    // Predicated region
    $region46: #{tpu_custom_call.1} parent=1 // pred_check
      _
    $region47: #{tpu_custom_call.1} parent=1 // pred_check_branch
      %1043 = sbr.rel (0) target = $region49
    $region48: #{tpu_custom_call.1} parent=1 // pred_region
      %1044 = dma.done [#allocation4], 32
    $region49: #{tpu_custom_call.1} parent=1 // pred_fallthru
      _
    %1045 = vsyncpa [#allocation3], 1
    %1046 = vsyncpa [#allocation6], 1
    %1047 = vsyncpa [#allocation9], 1
    %1048 = vsyncpa [#allocation4], 1

</llo_original>
